<compile_context>
chip_gen: v5e
topology: v5e:2x2
jax: 0.10.0
libtpu: 0.0.40
codegen_flags: <defaults>
</compile_context>

<pallas_src>
import functools

import jax
import jax.numpy as jnp
from jax import lax
from jax.experimental import pallas as pl
from jax.experimental.pallas import tpu as pltpu


def _rmsnorm_kernel(x_ref, w_ref, o_ref, *, eps):
    # x_ref: (TILE_ROWS, DIM), w_ref: (1, DIM), o_ref: (TILE_ROWS, DIM)
    x = x_ref[...]
    xf = x.astype(jnp.float32)                          # x.float()
    ms = jnp.mean(xf * xf, axis=-1, keepdims=True)      # .pow(2).mean(-1, keepdim=True)
    inv = lax.rsqrt(ms + eps)                           # rsqrt(... + eps)  (EUP)
    normed = (xf * inv).astype(x.dtype)                 # .type_as(x)  -- keep rounding step
    # `normed * weight` promotes to result_type(x, weight), matching PyTorch.
    o_ref[...] = (normed * w_ref[...]).astype(o_ref.dtype)


def _round_up(a, b):
    return ((a + b - 1) // b) * b


def _round_down(a, b):
    return (a // b) * b


def _vmem_capacity_bytes():
    try:
        return int(pltpu.get_tpu_info().vmem_capacity_bytes)
    except Exception:
        return 64 << 20  # conservative fallback (v7x per-TC VMEM)


def _choose_tile_rows(rows, dim, in_bytes, out_bytes, sublane):
    # The pipeline keeps ~2 input + 2 output blocks live (double buffering);
    # give each buffer ~1/16 of physical VMEM -> total working set ~1/4 VMEM.
    budget_per_buffer = _vmem_capacity_bytes() // 16
    bytes_per_row = dim * max(in_bytes, out_bytes)
    max_rows_vmem = max(sublane, _round_down(budget_per_buffer // bytes_per_row, sublane))
    tile = min(1024, max_rows_vmem, _round_up(rows, sublane))
    # Keep the parallel grid long enough (>= ~8 steps) to shard across megacore TCs.
    if rows >= 8 * sublane:
        tile = min(tile, max(sublane, _round_up(pl.cdiv(rows, 8), sublane)))
    return max(sublane, _round_down(tile, sublane))


def rmsnorm(x, weight, eps=1e-5, tile_rows=None):
    """x: (..., dim), weight: (dim,). Returns result_type(x, weight)."""
    dim = x.shape[-1]
    lead = x.shape[:-1]
    rows = 1
    for d in lead:
        rows *= d
    x2d = x.reshape(rows, dim)
    w2d = weight.reshape(1, dim)

    out_dtype = jnp.result_type(x.dtype, weight.dtype)
    in_bytes = jnp.dtype(x.dtype).itemsize
    out_bytes = jnp.dtype(out_dtype).itemsize
    w_bytes = jnp.dtype(weight.dtype).itemsize

    # Sublane packing: 8 rows/vreg for 4-byte dtypes, 16 for 2-byte, 32 for 1-byte.
    sublane = {4: 8, 2: 16, 1: 32}.get(in_bytes, 8)

    if tile_rows is None:
        tile_rows = _choose_tile_rows(rows, dim, in_bytes, out_bytes, sublane)
    tile_rows = max(sublane, _round_up(tile_rows, sublane))

    # Pad the row axis up to a tile multiple instead of asserting divisibility.
    padded_rows = _round_up(rows, tile_rows)
    if padded_rows != rows:
        x2d = jnp.pad(x2d, ((0, padded_rows - rows), (0, 0)))

    grid = (padded_rows // tile_rows,)

    # Explicit VMEM limit sized to the double-buffered working set (+headroom);
    # stays comfortably inside v7x's 64 MiB while unlocking big tiles on v5e/v6e.
    block_in = tile_rows * dim * in_bytes
    block_out = tile_rows * dim * out_bytes
    vmem_limit = 2 * (block_in + block_out) + 2 * dim * w_bytes + (4 << 20)
    vmem_limit = int(max(vmem_limit, 16 << 20))

    cost = pl.CostEstimate(
        flops=3 * rows * dim,
        transcendentals=rows,
        bytes_accessed=rows * dim * (in_bytes + out_bytes) + dim * w_bytes,
    )

    out2d = pl.pallas_call(
        functools.partial(_rmsnorm_kernel, eps=eps),
        out_shape=jax.ShapeDtypeStruct((padded_rows, dim), out_dtype),
        grid_spec=pltpu.PrefetchScalarGridSpec(
            num_scalar_prefetch=0,
            grid=grid,
            in_specs=[
                pl.BlockSpec((tile_rows, dim), lambda i: (i, 0)),
                pl.BlockSpec((1, dim), lambda i: (0, 0)),
            ],
            out_specs=pl.BlockSpec((tile_rows, dim), lambda i: (i, 0)),
        ),
        compiler_params=pltpu.CompilerParams(
            dimension_semantics=("parallel",),
            vmem_limit_bytes=vmem_limit,
        ),
        cost_estimate=cost,
    )(x2d, w2d)

    if padded_rows != rows:
        out2d = out2d[:rows]
    return out2d.reshape(*lead, dim)


def rmsnorm_ref(x, weight, eps=1e-5):
    xf = x.astype(jnp.float32)
    normed = (xf * lax.rsqrt(jnp.mean(xf * xf, axis=-1, keepdims=True) + eps)).astype(x.dtype)
    return normed * weight


if __name__ == "__main__":
    key = jax.random.PRNGKey(0)
    k1, k2, k3 = jax.random.split(key, 3)

    # Case 1: module defaults (weight = ones), small transformer-ish shape.
    batch, seq, dim = 2, 8, 128
    x = jax.random.normal(k1, (batch, seq, dim), dtype=jnp.float32)
    weight = jnp.ones((dim,), dtype=jnp.float32)   # nn.Parameter(torch.ones(dim))

    out = jax.block_until_ready(rmsnorm(x, weight, eps=1e-5))
    ref = rmsnorm_ref(x, weight, eps=1e-5)
    assert out.shape == x.shape and out.dtype == ref.dtype
    assert jnp.allclose(out, ref, atol=1e-5, rtol=1e-5), "mismatch vs reference (case 1)"

    # Case 2: non-uniform weight and a row count that is not a tile multiple
    # (exercises the padded remainder-block path).
    b2, s2 = 3, 5
    x2 = jax.random.normal(k2, (b2, s2, dim), dtype=jnp.float32)
    w2 = jax.random.normal(k3, (dim,), dtype=jnp.float32)
    out2 = jax.block_until_ready(rmsnorm(x2, w2, eps=1e-5))
    ref2 = rmsnorm_ref(x2, w2, eps=1e-5)
    assert out2.shape == x2.shape
    assert jnp.allclose(out2, ref2, atol=1e-5, rtol=1e-5), "mismatch vs reference (case 2)"

    print("KERNEL_OK")
</pallas_src>

<mosaic_0001>
module attributes {stable_mosaic.version = 11 : i64} {
  func.func @_rmsnorm_kernel(%arg0: i32, %arg1: memref<16x128xf32, #tpu.memory_space<vmem>>, %arg2: memref<1x128xf32, #tpu.memory_space<vmem>>, %arg3: memref<16x128xf32, #tpu.memory_space<vmem>>) attributes {dimension_semantics = [#tpu.dimension_semantics<parallel>], iteration_bounds = array<i64: 1>, scalar_prefetch = 0 : i64, scratch_operands = 0 : i64, tpu.core_type = #tpu.core_type<tc>, window_params = [{transform_indices = @transform_0, window_bounds = array<i64: 16, 128>}, {pipeline_mode = #tpu.pipeline_mode<synchronous>, transform_indices = @transform_1, window_bounds = array<i64: 1, 128>}, {transform_indices = @transform_2, window_bounds = array<i64: 16, 128>}]} {
    %c0 = arith.constant 0 : index
    %c0_0 = arith.constant 0 : index
    %0 = vector.load %arg1[%c0, %c0_0] : memref<16x128xf32, #tpu.memory_space<vmem>>, vector<16x128xf32>
    %1 = arith.mulf %0, %0 : vector<16x128xf32>
    %cst = arith.constant dense<0.000000e+00> : vector<16xf32>
    %2 = vector.multi_reduction <add>, %1, %cst [1] : vector<16x128xf32> to vector<16xf32>
    %3 = vector.shape_cast %2 : vector<16xf32> to vector<16x1xf32>
    %cst_1 = arith.constant 1.280000e+02 : f32
    %4 = vector.broadcast %cst_1 : f32 to vector<16x1xf32>
    %5 = arith.divf %3, %4 : vector<16x1xf32>
    %cst_2 = arith.constant 9.99999974E-6 : f32
    %6 = vector.broadcast %cst_2 : f32 to vector<16x1xf32>
    %7 = arith.addf %5, %6 : vector<16x1xf32>
    %8 = math.rsqrt %7 : vector<16x1xf32>
    %9 = vector.broadcast %8 : vector<16x1xf32> to vector<16x128xf32>
    %10 = arith.mulf %0, %9 : vector<16x128xf32>
    %c0_3 = arith.constant 0 : index
    %c0_4 = arith.constant 0 : index
    %11 = vector.load %arg2[%c0_3, %c0_4] : memref<1x128xf32, #tpu.memory_space<vmem>>, vector<1x128xf32>
    %12 = vector.broadcast %11 : vector<1x128xf32> to vector<16x128xf32>
    %13 = arith.mulf %10, %12 : vector<16x128xf32>
    %c0_5 = arith.constant 0 : index
    %c0_6 = arith.constant 0 : index
    %14 = vector.load %arg3[%c0_5, %c0_6] : memref<16x128xf32, #tpu.memory_space<vmem>>, vector<16x128xf32>
    tpu.vector_store %arg3[%c0_5, %c0_6], %13 {strides = array<i32>} : memref<16x128xf32, #tpu.memory_space<vmem>>, vector<16x128xf32>,
    return
  }
  func.func @transform_0(%arg0: i32) -> (i32, i32) {
    %c0_i32 = arith.constant 0 : i32
    %c0_i32_0 = arith.constant 0 : i32
    return %arg0, %c0_i32 : i32, i32
  }
  func.func @transform_1(%arg0: i32) -> (i32, i32) {
    %c0_i32 = arith.constant 0 : i32
    %c0_i32_0 = arith.constant 0 : i32
    %c0_i32_1 = arith.constant 0 : i32
    return %c0_i32, %c0_i32_0 : i32, i32
  }
  func.func @transform_2(%arg0: i32) -> (i32, i32) {
    %c0_i32 = arith.constant 0 : i32
    %c0_i32_0 = arith.constant 0 : i32
    return %arg0, %c0_i32 : i32, i32
  }
}

</mosaic_0001>

<llo_original>
// kernel: tpu_custom_call.1
$region0: #{tpu_custom_call.1}
  #allocation0 [shape = 'u32[]', space=smem, size = 0x4, offset = 0x4, fixed_abs, tag = 'smem constant byte address 0x4 - core index']
  #allocation1 [shape = 'u32[72,128]{1,0:T(1,128)}', space=vmem, size = 0x9000, scoped, tag = 'internal scratch']
  %s0 = inlined_call_operand.hbm [shape: f32[16,128], index: 0, kind: input, shape index: {}]
  %s1 = inlined_call_operand.hbm [shape: f32[1,128], index: 1, kind: input, shape index: {}]
  %s2 = inlined_call_operand.hbm [shape: f32[16,128], index: 2, kind: output, shape index: {}]
  %s3 = sld [smem:[#allocation0]]
  $region26: #{tpu_custom_call.1} parent=0
    _
  %s5 = ssub.s32 1, %s3
  %s6 = scalar_select 0, %s5, %s3
  $region1: #{tpu_custom_call.1} parent=0
    #allocation2 [shape = 'u8[8192]{0}', space=vmem, size = 0x2000, scoped, tag = 'input window, operand 0, single buffered']
    #allocation3 [shape = 's32[1]{0}', space=sflag, size = 0x4, scoped, tag = 'scoped memory for tpu_custom_call.1']
    #allocation4 [shape = 's32[1]{0}', space=sflag, size = 0x4, scoped, tag = 'scoped memory for tpu_custom_call.1']
    #allocation5 [shape = 'u8[512]{0}', space=vmem, size = 0x400, scoped, tag = 'input window, operand 1, single buffered']
    #allocation6 [shape = 's32[1]{0}', space=sflag, size = 0x4, scoped, tag = 'scoped memory for tpu_custom_call.1']
    #allocation7 [shape = 'u8[8192]{0}', space=vmem, size = 0x2000, scoped, tag = 'output window, operand 0, single buffered']
    %7 = vsyncpa [#allocation3], 0
    %8 = vsyncpa [#allocation6], 0
    %9 = vsyncpa [#allocation4], 0
    // Predicated region
    $region2: #{tpu_custom_call.1} parent=1 // pred_check
      _
    $region3: #{tpu_custom_call.1} parent=1 // pred_check_branch
      %11 = sbr.rel (0) target = $region5
    $region4: #{tpu_custom_call.1} parent=1 // pred_region
      %13 = vsyncadd [#allocation3], 0
      %s14 = sshll.u32 %s0, 4
      %s15 = int_to_ptr.hbm [resolvable:$true] %s14
      %s16 = sshll.u32 [#allocation2], 4
      %s17 = int_to_ptr.vmem [resolvable:$true] %s16
      %22 = dma.hbm_to_vmem [thread:$0]  %s15, 256, %s17, [#allocation3], 128, 128, 8
    $region5: #{tpu_custom_call.1} parent=1 // pred_fallthru
      _
    // Predicated region
    $region6: #{tpu_custom_call.1} parent=1 // pred_check
      _
    $region7: #{tpu_custom_call.1} parent=1 // pred_check_branch
      %24 = sbr.rel (0) target = $region9
    $region8: #{tpu_custom_call.1} parent=1 // pred_region
      %26 = vsyncadd [#allocation6], 0
      %s28 = sshll.u32 %s1, 4
      %s29 = int_to_ptr.hbm [resolvable:$true] %s28
      %s30 = sshll.u32 [#allocation5], 4
      %s31 = int_to_ptr.vmem [resolvable:$true] %s30
      %33 = dma.hbm_to_vmem [thread:$0]  %s29, 16, %s31, [#allocation6]
    $region9: #{tpu_custom_call.1} parent=1 // pred_fallthru
      _
    // Predicated region
    $region10: #{tpu_custom_call.1} parent=1 // pred_check
      _
    $region11: #{tpu_custom_call.1} parent=1 // pred_check_branch
      %35 = sbr.rel (0) target = $region13
    $region12: #{tpu_custom_call.1} parent=1 // pred_region
      %37 = dma.done [#allocation3], 256
    $region13: #{tpu_custom_call.1} parent=1 // pred_fallthru
      _
    // Predicated region
    $region14: #{tpu_custom_call.1} parent=1 // pred_check
      _
    $region15: #{tpu_custom_call.1} parent=1 // pred_check_branch
      %39 = sbr.rel (0) target = $region17
    $region16: #{tpu_custom_call.1} parent=1 // pred_region
      %41 = dma.done [#allocation6], 16
    $region17: #{tpu_custom_call.1} parent=1 // pred_fallthru
      _
    %v42 = vld [vmem:[#allocation2] sm:$0xff]
    %v43 = vld [vmem:[#allocation2 + $0x8] sm:$0xff]
    %v44 = vmul.f32 %v42, %v42
    %v45 = vmul.f32 %v43, %v43
    %46 = vadd.xlane.f32.xlu0 %v44
    %v47 = vpop.xlane.xlu0 %46
    %48 = vadd.xlane.f32.xlu0 %v45
    %v49 = vpop.xlane.xlu0 %48
    %v50 = vrcp.pop 128.0
    %v51 = vmul.f32 128.0, %v50
    %v52 = vsub.f32 1.0, %v51
    %v53 = vmul.f32 %v50, %v52
    %v54 = vadd.f32 %v50, %v53
    %vm55 = vweird.f32 %v50
    %v56 = vsel %vm55, %v50, %v54
    %v57 = vmul.f32 %v47, %v56
    %v58 = vmul.f32 %v49, %v56
    %v59 = vadd.f32 %v57, 1e-05
    %v60 = vadd.f32 %v58, 1e-05
    %v61 = vrsqrt.pop %v59
    %v62 = vmul.f32 %v61, %v59
    %v63 = vmul.f32 %v62, %v61
    %v64 = vmul.f32 0.5, %v63
    %v65 = vsub.f32 1.5, %v64
    %v66 = vmul.f32 %v61, %v65
    %vm67 = vweird.f32 %v59
    %vm68 = vweird.f32 %v61
    %vm69 = vmor %vm67, %vm68
    %v70 = vsel %vm69, %v61, %v66
    %v71 = vrsqrt.pop %v60
    %v72 = vmul.f32 %v71, %v60
    %v73 = vmul.f32 %v72, %v71
    %v74 = vmul.f32 0.5, %v73
    %v75 = vsub.f32 1.5, %v74
    %v76 = vmul.f32 %v71, %v75
    %vm77 = vweird.f32 %v60
    %vm78 = vweird.f32 %v71
    %vm79 = vmor %vm77, %vm78
    %v80 = vsel %vm79, %v71, %v76
    %v81 = vmul.f32 %v42, %v70
    %v82 = vmul.f32 %v43, %v80
    %v83 = vld [vmem:[#allocation5] sm:$0x1]
    %v85 = vperm.slane %v83, 0
    %v87 = vmul.f32 %v81, %v85
    %v88 = vmul.f32 %v82, %v85
    %89 = vst [vmem:[#allocation7] sm:$0xff] %v87
    %90 = vst [vmem:[#allocation7 + $0x8] sm:$0xff] %v88
    // Predicated region
    $region18: #{tpu_custom_call.1} parent=1 // pred_check
      _
    $region19: #{tpu_custom_call.1} parent=1 // pred_check_branch
      %92 = sbr.rel (0) target = $region21
    $region20: #{tpu_custom_call.1} parent=1 // pred_region
      %94 = vsyncadd [#allocation4], 0
      %s95 = sshll.u32 [#allocation7], 4
      %s96 = int_to_ptr.vmem [resolvable:$true] %s95
      %s97 = sshll.u32 %s2, 4
      %s98 = int_to_ptr.hbm [resolvable:$true] %s97
      %103 = dma.vmem_to_hbm [thread:$0]  %s96, 256, %s98, [#allocation4], 128, 128, 8
    $region21: #{tpu_custom_call.1} parent=1 // pred_fallthru
      _
    // Predicated region
    $region22: #{tpu_custom_call.1} parent=1 // pred_check
      _
    $region23: #{tpu_custom_call.1} parent=1 // pred_check_branch
      %105 = sbr.rel (0) target = $region25
    $region24: #{tpu_custom_call.1} parent=1 // pred_region
      %107 = dma.done [#allocation4], 256
    $region25: #{tpu_custom_call.1} parent=1 // pred_fallthru
      _
    %108 = vsyncpa [#allocation3], 1
    %109 = vsyncpa [#allocation6], 1
    %110 = vsyncpa [#allocation4], 1

</llo_original>
